<compile_context>
chip_gen: v6e
topology: v6e:2x2x1
jax: 0.10.0
libtpu: 0.0.40
codegen_flags: <defaults>
</compile_context>

<pallas_src>
import functools

import jax
import jax.numpy as jnp
from jax.experimental import pallas as pl
from jax.experimental.pallas import tpu as pltpu


def _dwconv_kernel(x_ref, w_ref, b_ref, o_ref, *, pad_left, pad_right):
    """Depthwise 1-D conv over one (channel-tile, length) block.

    x_ref: (tc, L)       input rows, time on lanes
    w_ref: (tc, K)       per-channel taps
    b_ref: (tc, 1)       per-channel bias
    o_ref: (tc, L_out)   L_out = L + pad_left + pad_right - K + 1
    """
    tc, L = x_ref.shape
    K = w_ref.shape[-1]
    L_out = o_ref.shape[-1]

    x = x_ref[...].astype(jnp.float32)

    # Fused F.pad: zero-pad along the lane (time) axis in-register.
    parts = []
    if pad_left > 0:
        parts.append(jnp.zeros((tc, pad_left), jnp.float32))
    parts.append(x)
    if pad_right > 0:
        parts.append(jnp.zeros((tc, pad_right), jnp.float32))
    xp = jnp.concatenate(parts, axis=1) if len(parts) > 1 else x

    w = w_ref[...].astype(jnp.float32)
    acc = jnp.zeros((tc, L_out), jnp.float32)
    # K is small & static: fully unrolled shifted multiply-add (VPU work).
    for k in range(K):
        acc = acc + xp[:, k:k + L_out] * w[:, k:k + 1]

    o_ref[...] = (acc + b_ref[...].astype(jnp.float32)).astype(o_ref.dtype)


def _pick_channel_tile(C, L, itemsize, target_bytes=2 << 20):
    """Channel-tile: multiple of 8 dividing C, sized so the x tile stays ~2 MiB."""
    if C % 8 != 0:
        return C  # small / ragged channel count: single full-channel block
    budget_rows = max(8, (target_bytes // max(1, L * itemsize)) // 8 * 8)
    tc = min(C, budget_rows)
    # Prefer >=2 channel tiles (pipelining + megacore) when it still divides C.
    if tc == C and C % 16 == 0:
        tc = C // 2
    while C % tc != 0:
        tc -= 8
    return max(tc, 8)


def depthwise_conv1d(x, weight, bias, padding):
    """x: (B, chan_in, L); weight: (chan_out, 1, K); bias: (chan_out,).

    Returns (B, chan_out, L + pad_left + pad_right - K + 1), matching
    F.pad(x, padding) followed by nn.Conv1d(chan_in, chan_out, K, groups=chan_in).
    """
    B, C_in, L = x.shape
    C_out, _, K = weight.shape
    pad_left, pad_right = padding
    L_out = L + pad_left + pad_right - K + 1
    assert L_out > 0, "kernel larger than padded input"
    assert C_out % C_in == 0, "grouped Conv1d requires chan_out % chan_in == 0"

    mult = C_out // C_in
    if mult > 1:
        # General channel multiplier: output channel j reads input channel j // mult.
        # TODO(synk): fold the multiplier into the kernel instead of repeating the input.
        x = jnp.repeat(x, mult, axis=1)
    C = C_out

    w2 = weight.reshape(C, K).astype(x.dtype)
    b2 = bias.reshape(C, 1).astype(x.dtype)

    tc = _pick_channel_tile(C, L, jnp.dtype(x.dtype).itemsize)
    grid = (B, C // tc)

    kernel = functools.partial(_dwconv_kernel, pad_left=pad_left, pad_right=pad_right)

    bytes_accessed = int(
        (x.size + w2.size + b2.size + B * C * L_out) * jnp.dtype(x.dtype).itemsize)
    cost = pl.CostEstimate(
        flops=int(2 * B * C * L_out * K),
        transcendentals=0,
        bytes_accessed=bytes_accessed)

    out = pl.pallas_call(
        kernel,
        out_shape=jax.ShapeDtypeStruct((B, C, L_out), x.dtype),
        grid_spec=pltpu.PrefetchScalarGridSpec(
            num_scalar_prefetch=0,
            grid=grid,
            in_specs=[
                pl.BlockSpec((None, tc, L), lambda b, c: (b, c, 0)),   # x tile
                pl.BlockSpec((tc, K), lambda b, c: (c, 0)),            # taps
                pl.BlockSpec((tc, 1), lambda b, c: (c, 0)),            # bias
            ],
            out_specs=pl.BlockSpec((None, tc, L_out), lambda b, c: (b, c, 0)),
        ),
        compiler_params=pltpu.CompilerParams(
            dimension_semantics=("parallel", "parallel")),
        cost_estimate=cost,
    )(x, w2, b2)
    return out


if __name__ == "__main__":
    key = jax.random.PRNGKey(0)
    batch, chan, length, ksize = 2, 4, 16, 3
    padding = (1, 1)  # calc_same_padding(3) as used in the Conformer conv module

    kx, kw, kb = jax.random.split(key, 3)
    x = jax.random.normal(kx, (batch, chan, length), jnp.float32)
    # nn.Conv1d init: uniform(-1/sqrt(fan_in), ...) with fan_in = (chan_in/groups)*K = K
    lim = 1.0 / (ksize ** 0.5)
    weight = jax.random.uniform(kw, (chan, 1, ksize), jnp.float32, -lim, lim)
    bias = jax.random.uniform(kb, (chan,), jnp.float32, -lim, lim)

    y = depthwise_conv1d(x, weight, bias, padding)
    y = jax.block_until_ready(y)

    # Pure-JAX reference of the same math: F.pad + depthwise conv + bias.
    pad_l, pad_r = padding
    x_pad = jnp.pad(x, ((0, 0), (0, 0), (pad_l, pad_r)))
    L_out = length + pad_l + pad_r - ksize + 1
    y_ref = jnp.zeros((batch, chan, L_out), jnp.float32)
    for k in range(ksize):
        y_ref = y_ref + x_pad[:, :, k:k + L_out] * weight[:, 0, k][None, :, None]
    y_ref = y_ref + bias[None, :, None]

    assert y.shape == (batch, chan, L_out)
    assert jnp.allclose(y, y_ref, atol=1e-5, rtol=1e-5)
    print("KERNEL_OK")
</pallas_src>

<mosaic_0001>
module attributes {stable_mosaic.version = 11 : i64} {
  func.func @_dwconv_kernel(%arg0: i32, %arg1: i32, %arg2: memref<1x4x16xf32, #tpu.memory_space<vmem>>, %arg3: memref<4x3xf32, #tpu.memory_space<vmem>>, %arg4: memref<4x1xf32, #tpu.memory_space<vmem>>, %arg5: memref<1x4x16xf32, #tpu.memory_space<vmem>>) attributes {dimension_semantics = [#tpu.dimension_semantics<parallel>, #tpu.dimension_semantics<parallel>], iteration_bounds = array<i64: 2, 1>, scalar_prefetch = 0 : i64, scratch_operands = 0 : i64, tpu.core_type = #tpu.core_type<tc>, window_params = [{transform_indices = @transform_0, window_bounds = array<i64: 1, 4, 16>}, {transform_indices = @transform_1, window_bounds = array<i64: 4, 3>}, {transform_indices = @transform_2, window_bounds = array<i64: 4, 1>}, {transform_indices = @transform_3, window_bounds = array<i64: 1, 4, 16>}]} {
    %c0 = arith.constant 0 : index
    %c0_0 = arith.constant 0 : index
    %c0_1 = arith.constant 0 : index
    %0 = vector.load %arg2[%c0, %c0_0, %c0_1] : memref<1x4x16xf32, #tpu.memory_space<vmem>>, vector<1x4x16xf32>
    %1 = vector.shape_cast %0 : vector<1x4x16xf32> to vector<4x16xf32>
    %cst = arith.constant 0.000000e+00 : f32
    %2 = vector.broadcast %cst : f32 to vector<4x1xf32>
    %cst_2 = arith.constant 0.000000e+00 : f32
    %3 = vector.broadcast %cst_2 : f32 to vector<4x1xf32>
    %4 = tpu.concatenate %2, %1, %3 in 1 : vector<4x1xf32>, vector<4x16xf32>, vector<4x1xf32> -> vector<4x18xf32>
    %c0_3 = arith.constant 0 : index
    %c0_4 = arith.constant 0 : index
    %5 = vector.load %arg3[%c0_3, %c0_4] : memref<4x3xf32, #tpu.memory_space<vmem>>, vector<4x3xf32>
    %cst_5 = arith.constant 0.000000e+00 : f32
    %6 = vector.broadcast %cst_5 : f32 to vector<4x16xf32>
    %7 = vector.extract_strided_slice %4 {offsets = [0, 0], sizes = [4, 16], strides = [1, 1]} : vector<4x18xf32> to vector<4x16xf32>
    %8 = vector.extract_strided_slice %5 {offsets = [0, 0], sizes = [4, 1], strides = [1, 1]} : vector<4x3xf32> to vector<4x1xf32>
    %9 = vector.broadcast %8 : vector<4x1xf32> to vector<4x16xf32>
    %10 = arith.mulf %7, %9 : vector<4x16xf32>
    %11 = arith.addf %6, %10 : vector<4x16xf32>
    %12 = vector.extract_strided_slice %4 {offsets = [0, 1], sizes = [4, 16], strides = [1, 1]} : vector<4x18xf32> to vector<4x16xf32>
    %13 = vector.extract_strided_slice %5 {offsets = [0, 1], sizes = [4, 1], strides = [1, 1]} : vector<4x3xf32> to vector<4x1xf32>
    %14 = vector.broadcast %13 : vector<4x1xf32> to vector<4x16xf32>
    %15 = arith.mulf %12, %14 : vector<4x16xf32>
    %16 = arith.addf %11, %15 : vector<4x16xf32>
    %17 = vector.extract_strided_slice %4 {offsets = [0, 2], sizes = [4, 16], strides = [1, 1]} : vector<4x18xf32> to vector<4x16xf32>
    %18 = vector.extract_strided_slice %5 {offsets = [0, 2], sizes = [4, 1], strides = [1, 1]} : vector<4x3xf32> to vector<4x1xf32>
    %19 = vector.broadcast %18 : vector<4x1xf32> to vector<4x16xf32>
    %20 = arith.mulf %17, %19 : vector<4x16xf32>
    %21 = arith.addf %16, %20 : vector<4x16xf32>
    %c0_6 = arith.constant 0 : index
    %c0_7 = arith.constant 0 : index
    %22 = vector.load %arg4[%c0_6, %c0_7] : memref<4x1xf32, #tpu.memory_space<vmem>>, vector<4x1xf32>
    %23 = vector.broadcast %22 : vector<4x1xf32> to vector<4x16xf32>
    %24 = arith.addf %21, %23 : vector<4x16xf32>
    %c0_8 = arith.constant 0 : index
    %c0_9 = arith.constant 0 : index
    %c0_10 = arith.constant 0 : index
    %25 = vector.load %arg5[%c0_8, %c0_9, %c0_10] : memref<1x4x16xf32, #tpu.memory_space<vmem>>, vector<1x4x16xf32>
    %26 = vector.shape_cast %25 : vector<1x4x16xf32> to vector<4x16xf32>
    %27 = vector.shape_cast %24 : vector<4x16xf32> to vector<1x4x16xf32>
    tpu.vector_store %arg5[%c0_8, %c0_9, %c0_10], %27 {strides = array<i32>} : memref<1x4x16xf32, #tpu.memory_space<vmem>>, vector<1x4x16xf32>,
    return
  }
  func.func @transform_0(%arg0: i32, %arg1: i32) -> (i32, i32, i32) {
    %c0_i32 = arith.constant 0 : i32
    %c0_i32_0 = arith.constant 0 : i32
    return %arg0, %arg1, %c0_i32 : i32, i32, i32
  }
  func.func @transform_1(%arg0: i32, %arg1: i32) -> (i32, i32) {
    %c0_i32 = arith.constant 0 : i32
    %c0_i32_0 = arith.constant 0 : i32
    return %arg1, %c0_i32 : i32, i32
  }
  func.func @transform_2(%arg0: i32, %arg1: i32) -> (i32, i32) {
    %c0_i32 = arith.constant 0 : i32
    %c0_i32_0 = arith.constant 0 : i32
    return %arg1, %c0_i32 : i32, i32
  }
  func.func @transform_3(%arg0: i32, %arg1: i32) -> (i32, i32, i32) {
    %c0_i32 = arith.constant 0 : i32
    %c0_i32_0 = arith.constant 0 : i32
    return %arg0, %arg1, %c0_i32 : i32, i32, i32
  }
}

</mosaic_0001>

<llo_original>
// kernel: tpu_custom_call.1
$region0: #{tpu_custom_call.1}
  #allocation0 [shape = 'u32[]', space=smem, size = 0x4, offset = 0x4, fixed_abs, tag = 'smem constant byte address 0x4 - core index']
  #allocation1 [shape = 'u32[144,128]{1,0:T(1,128)}', space=vmem, size = 0x12000, scoped, tag = 'internal scratch']
  %s0 = inlined_call_operand.hbm [shape: f32[2,4,16], index: 0, kind: input, shape index: {}]
  %s1 = inlined_call_operand.vmem [shape: f32[4,3], index: 1, kind: input, shape index: {}]
  %s2 = inlined_call_operand.vmem [shape: f32[4,1], index: 2, kind: input, shape index: {}]
  %s3 = inlined_call_operand.hbm [shape: f32[2,4,16], index: 3, kind: output, shape index: {}]
  %s4 = sld [smem:[#allocation0]]
  $region49: #{tpu_custom_call.1} parent=0
    _
  %s6 = ssub.s32 1, %s4
  %s7 = scalar_select 0, %s6, %s4
  $region1: #{tpu_custom_call.1} parent=0
    #allocation2 [shape = 'u8[4096]{0}', space=vmem, size = 0x1000, scoped, tag = 'input window, operand 0']
    #allocation3 [shape = 's32[2]{0}', space=sflag, size = 0x8, scoped, tag = 'scoped memory for tpu_custom_call.1']
    #allocation4 [shape = 's32[2]{0}', space=sflag, size = 0x8, scoped, tag = 'scoped memory for tpu_custom_call.1']
    #allocation5 [shape = 'u8[4096]{0}', space=vmem, size = 0x1000, scoped, tag = 'output window, operand 0']
    %8 = vsyncpa [#allocation3], 0
    %s9 = scalar_lea.sflag [#allocation3], 1
    %10 = vsyncpa %s9, 0
    %11 = vsyncpa [#allocation4], 0
    %s12 = scalar_lea.sflag [#allocation4], 1
    %13 = vsyncpa %s12, 0
    loop: start=0, step=1, limit=4
    $region2: #{tpu_custom_call.1} parent=1 // loop_pre_header
      _
    $region3: #{tpu_custom_call.1} parent=1 // loop_header
      %s15 = sphi 0, %s19
      %p16 = scmp.ge.s32.totalorder %s15, 4
      %s22 = sphi 0, %s34
      %s23 = sphi 0, %s30
      %s24 = sphi 0, %s22
      %s25 = sphi 0, %s23
      %s26 = sphi 0, %s24
      %s27 = sphi 0, %s25
      %s39 = sphi 0, %s41
      %s42 = sphi 0, %s39
      %s43 = sphi 0, %s42
      %s59 = sphi 0, %s43
      %s65 = sphi 0, %s67
      %s68 = sphi 0, %s65
      %s69 = sphi 0, %s68
      %s85 = sphi 0, %s69
      %s91 = sphi 0, %s93
      %s94 = sphi 0, %s91
      %s95 = sphi 0, %s94
      %s111 = sphi 0, %s95
      %s119 = sphi 0, %s121
      %s122 = sphi 0, %s119
      %s123 = sphi 0, %s122
      %s139 = sphi 0, %s123
    $region4: #{tpu_custom_call.1} parent=1 // loop_header_branch
      %18 = sbr.rel (%p16) target = $region8
    $region5: #{tpu_custom_call.1} parent=1 // loop_body
      %s20 = ssub.s32 %s15, 1
      %s21 = ssub.s32 %s15, 2
      %s28 = sadd.s32 1, %s23
      %p29 = scmp.ge.s32.totalorder %s28, 1
      %s30 = scalar_select %p29, 0, %s28
      %s31 = sadd.s32 1, %s22
      %s32 = scalar_select %p29, %s31, %s22
      %p33 = scmp.ge.s32.totalorder %s32, 2
      %s34 = scalar_select %p33, 0, %s32
      %s35 = ssub.s32 %s22, %s34
      %s36 = ssub.s32 %s23, %s30
      %s37 = sor.u32 %s35, %s36
      %p38 = scmp.eq.s32.totalorder %s37, 0
      %s40 = sadd.s32 %s39, 1
      %s41 = scalar_select %p38, %s39, %s40
      %p44 = pneg %p38
      %p45 = scmp.eq.s32.totalorder %s15, 1
      %p46 = por %p44, %p45
      %p47 = scmp.ne.s32.totalorder %s39, %s42
      %p48 = scmp.eq.s32.totalorder %s15, 0
      %p49 = por %p47, %p48
      %p50 = scmp.ne.s32.totalorder %s39, %s42
      %p51 = scmp.eq.s32.totalorder %s20, 1
      %p52 = por %p50, %p51
      %p53 = scmp.ne.s32.totalorder %s42, %s43
      %p54 = scmp.eq.s32.totalorder %s20, 0
      %p55 = por %p53, %p54
      %p56 = scmp.ne.s32.totalorder %s42, %s43
      %p57 = scmp.eq.s32.totalorder %s21, 1
      %p58 = por %p56, %p57
      %p60 = scmp.ne.s32.totalorder %s43, %s59
      %p61 = scmp.eq.s32.totalorder %s21, 0
      %p62 = por %p60, %p61
      %s63 = ssub.s32 %s23, %s30
      %p64 = scmp.eq.s32.totalorder %s63, 0
      %s66 = sadd.s32 %s65, 1
      %s67 = scalar_select %p64, %s65, %s66
      %p70 = pneg %p64
      %p71 = scmp.eq.s32.totalorder %s15, 1
      %p72 = por %p70, %p71
      %p73 = scmp.ne.s32.totalorder %s65, %s68
      %p74 = scmp.eq.s32.totalorder %s15, 0
      %p75 = por %p73, %p74
      %p76 = scmp.ne.s32.totalorder %s65, %s68
      %p77 = scmp.eq.s32.totalorder %s20, 1
      %p78 = por %p76, %p77
      %p79 = scmp.ne.s32.totalorder %s68, %s69
      %p80 = scmp.eq.s32.totalorder %s20, 0
      %p81 = por %p79, %p80
      %p82 = scmp.ne.s32.totalorder %s68, %s69
      %p83 = scmp.eq.s32.totalorder %s21, 1
      %p84 = por %p82, %p83
      %p86 = scmp.ne.s32.totalorder %s69, %s85
      %p87 = scmp.eq.s32.totalorder %s21, 0
      %p88 = por %p86, %p87
      %s89 = ssub.s32 %s23, %s30
      %p90 = scmp.eq.s32.totalorder %s89, 0
      %s92 = sadd.s32 %s91, 1
      %s93 = scalar_select %p90, %s91, %s92
      %p96 = pneg %p90
      %p97 = scmp.eq.s32.totalorder %s15, 1
      %p98 = por %p96, %p97
      %p99 = scmp.ne.s32.totalorder %s91, %s94
      %p100 = scmp.eq.s32.totalorder %s15, 0
      %p101 = por %p99, %p100
      %p102 = scmp.ne.s32.totalorder %s91, %s94
      %p103 = scmp.eq.s32.totalorder %s20, 1
      %p104 = por %p102, %p103
      %p105 = scmp.ne.s32.totalorder %s94, %s95
      %p106 = scmp.eq.s32.totalorder %s20, 0
      %p107 = por %p105, %p106
      %p108 = scmp.ne.s32.totalorder %s94, %s95
      %p109 = scmp.eq.s32.totalorder %s21, 1
      %p110 = por %p108, %p109
      %p112 = scmp.ne.s32.totalorder %s95, %s111
      %p113 = scmp.eq.s32.totalorder %s21, 0
      %p114 = por %p112, %p113
      %s115 = ssub.s32 %s22, %s34
      %s116 = ssub.s32 %s23, %s30
      %s117 = sor.u32 %s115, %s116
      %p118 = scmp.eq.s32.totalorder %s117, 0
      %s120 = sadd.s32 %s119, 1
      %s121 = scalar_select %p118, %s119, %s120
      %p124 = pneg %p118
      %p125 = scmp.eq.s32.totalorder %s15, 1
      %p126 = por %p124, %p125
      %p127 = scmp.ne.s32.totalorder %s119, %s122
      %p128 = scmp.eq.s32.totalorder %s15, 0
      %p129 = por %p127, %p128
      %p130 = scmp.ne.s32.totalorder %s119, %s122
      %p131 = scmp.eq.s32.totalorder %s20, 1
      %p132 = por %p130, %p131
      %p133 = scmp.ne.s32.totalorder %s122, %s123
      %p134 = scmp.eq.s32.totalorder %s20, 0
      %p135 = por %p133, %p134
      %p136 = scmp.ne.s32.totalorder %s122, %s123
      %p137 = scmp.eq.s32.totalorder %s21, 1
      %p138 = por %p136, %p137
      %p140 = scmp.ne.s32.totalorder %s123, %s139
      %p141 = scmp.eq.s32.totalorder %s21, 0
      %p142 = por %p140, %p141
      %p143 = scmp.le.s32.totalorder 1, %s15
      %p144 = scmp.lt.s32.totalorder %s15, 3
      %p145 = pnand %p143, %p144
      %p146 = pneg %p145
      // Predicated region
      $region9: #{tpu_custom_call.1} parent=5 // pred_check
        _
      $region10: #{tpu_custom_call.1} parent=5 // pred_check_branch
        %148 = sbr.rel (%p145) target = $region12
      $region11: #{tpu_custom_call.1} parent=5 // pred_region
        %s149 = ssub.s32 %s15, 1
        // Predicated region
        $region13: #{tpu_custom_call.1} parent=11 // pred_check
          %p150 = pneg %p81
        $region14: #{tpu_custom_call.1} parent=11 // pred_check_branch
          %152 = sbr.rel (%p150) target = $region16
        $region15: #{tpu_custom_call.1} parent=11 // pred_region
          %p153 = scmp.lt.s32.totalorder %s25, 0
          %s154 = scalar_select %p153, %s25, 0
          %s155 = smul.addr %s154, 4
          %s156 = scalar_lea.vmem %s1, %s155
        $region16: #{tpu_custom_call.1} parent=11 // pred_fallthru
          _
        // Predicated region
        $region17: #{tpu_custom_call.1} parent=11 // pred_check
          %p157 = pneg %p107
        $region18: #{tpu_custom_call.1} parent=11 // pred_check_branch
          %159 = sbr.rel (%p157) target = $region20
        $region19: #{tpu_custom_call.1} parent=11 // pred_region
          %p160 = scmp.lt.s32.totalorder %s25, 0
          %s161 = scalar_select %p160, %s25, 0
          %s162 = smul.addr %s161, 4
          %s163 = scalar_lea.vmem %s2, %s162
        $region20: #{tpu_custom_call.1} parent=11 // pred_fallthru
          _
      $region12: #{tpu_custom_call.1} parent=5 // pred_fallthru
        _
      %p164 = scmp.lt.s32.totalorder %s15, 2
      // Predicated region
      $region21: #{tpu_custom_call.1} parent=5 // pred_check
        %p165 = pneg %p164
      $region22: #{tpu_custom_call.1} parent=5 // pred_check_branch
        %167 = sbr.rel (%p165) target = $region24
      $region23: #{tpu_custom_call.1} parent=5 // pred_region
        // Predicated region
        $region25: #{tpu_custom_call.1} parent=23 // pred_check
          %p168 = pneg %p49
        $region26: #{tpu_custom_call.1} parent=23 // pred_check_branch
          %170 = sbr.rel (%p168) target = $region28
        $region27: #{tpu_custom_call.1} parent=23 // pred_region
          %s171 = sand.u32 %s39, 1
          %s172 = scalar_lea.sflag [#allocation3], %s171
          %s173 = sand.u32 %s39, 1
          %s174 = smul.addr %s173, 4
          %s175 = scalar_lea.vmem [#allocation2], %s174
          %s177 = ssub.s32 64, 64
          %178 = vsyncadd %s172, %s177
          %s179 = sadd.s32 %s23, %s22
          %s180 = smul.addr %s179, 64
          %s181 = scalar_lea.hbm %s0, %s180
          %s183 = sshll.u32 %s175, 4
          %s184 = int_to_ptr.vmem [resolvable:$true] %s183
          %186 = dma.hbm_to_vmem [thread:$0]  %s181, 64, %s184, %s172
        $region28: #{tpu_custom_call.1} parent=23 // pred_fallthru
          _
      $region24: #{tpu_custom_call.1} parent=5 // pred_fallthru
        _
      %p187 = scmp.le.s32.totalorder 1, %s15
      %p188 = scmp.lt.s32.totalorder %s15, 3
      %p189 = pnand %p187, %p188
      %p190 = pneg %p189
      // Predicated region
      $region29: #{tpu_custom_call.1} parent=5 // pred_check
        _
      $region30: #{tpu_custom_call.1} parent=5 // pred_check_branch
        %192 = sbr.rel (%p189) target = $region32
      $region31: #{tpu_custom_call.1} parent=5 // pred_region
        %s193 = ssub.s32 %s15, 1
        %s194 = sand.u32 %s42, 1
        %s195 = scalar_lea.sflag [#allocation3], %s194
        %s196 = sand.u32 %s42, 1
        %s197 = smul.addr %s196, 4
        %s198 = scalar_lea.vmem [#allocation2], %s197
        // Predicated region
        $region33: #{tpu_custom_call.1} parent=31 // pred_check
          %p199 = pneg %p55
        $region34: #{tpu_custom_call.1} parent=31 // pred_check_branch
          %201 = sbr.rel (%p199) target = $region36
        $region35: #{tpu_custom_call.1} parent=31 // pred_region
          %202 = dma.done %s195, 64
        $region36: #{tpu_custom_call.1} parent=31 // pred_fallthru
          _
        %s203 = sand.u32 %s42, 1
        %s204 = scalar_lea.sflag [#allocation3], %s203
        %s205 = sand.u32 %s42, 1
        %s206 = smul.addr %s205, 4
        %s207 = scalar_lea.vmem [#allocation2], %s206
        %p208 = pneg %p55
        %p209 = pneg %p52
        %p210 = scmp.lt.s32.totalorder %s25, 0
        %s211 = scalar_select %p210, %s25, 0
        %s212 = smul.addr %s211, 4
        %s213 = scalar_lea.vmem %s1, %s212
        %p214 = pneg %p81
        %p215 = pneg %p78
        %p216 = scmp.lt.s32.totalorder %s25, 0
        %s217 = scalar_select %p216, %s25, 0
        %s218 = smul.addr %s217, 4
        %s219 = scalar_lea.vmem %s2, %s218
        %p220 = pneg %p107
        %p221 = pneg %p104
        %p222 = pneg %p135
        %p223 = pneg %p132
        %s224 = sand.u32 %s122, 1
        %s225 = scalar_lea.sflag [#allocation4], %s224
        %s226 = sand.u32 %s122, 1
        %s227 = smul.addr %s226, 4
        %s228 = scalar_lea.vmem [#allocation5], %s227
        %p229 = scmp.lt.s32.totalorder %s25, 0
        %s230 = scalar_select %p229, %s25, 0
        %s231 = smul.addr %s230, 4
        %s232 = scalar_lea.vmem %s1, %s231
        %p233 = scmp.lt.s32.totalorder %s25, 0
        %s234 = scalar_select %p233, %s25, 0
        %s235 = smul.addr %s234, 4
        %s236 = scalar_lea.vmem %s2, %s235
        %v237 = vld [vmem:[%s198] sm:$0xf]
        %239 = vrot.lane.b32.xlu0 %v237, 1
        %v240 = vpop.permute.xlu0 %239
        %vm242 = vcmask 7168
        %v243 = vsel %vm242, 0.0, %v240
        %vm244 = vcmask 138240
        %v245 = vsel %vm244, %v243, 0.0
        %v246 = vld [vmem:[%s232] sm:$0xf]
        %248 = vset.pattern.permute.xlu0 0
        %249 = vperm.xlu0 %248, %v246
        %v250 = vpop.permute.xlu0 %249
        %v252 = vmul.f32 %v245, %v250
        %v253 = vadd.f32 %v252, 0.0
        %254 = vset.pattern.permute.xlu0 1
        %255 = vperm.xlu0 %254, %v246
        %v256 = vpop.permute.xlu0 %255
        %v258 = vmul.f32 %v245, %v256
        %260 = vrot.lane.b32.xlu0 %v258, 127
        %v261 = vpop.permute.xlu0 %260
        %v263 = vadd.f32 %v253, %v261
        %264 = vset.pattern.permute.xlu0 2
        %265 = vperm.xlu0 %264, %v246
        %v266 = vpop.permute.xlu0 %265
        %v268 = vmul.f32 %v245, %v266
        %270 = vrot.lane.b32.xlu0 %v268, 126
        %v271 = vpop.permute.xlu0 %270
        %v273 = vadd.f32 %v263, %v271
        %v274 = vld [vmem:[%s236] sm:$0xf]
        %276 = vset.pattern.permute.xlu0 0
        %277 = vperm.xlu0 %276, %v274
        %v278 = vpop.permute.xlu0 %277
        %v280 = vadd.f32 %v273, %v278
        %vm281 = vcmask 125952
        %282 = vst.msk [vmem:[%s228] sm:$0xf] %vm281, %v280
        %s283 = sand.u32 %s122, 1
        %s284 = scalar_lea.sflag [#allocation4], %s283
        %s285 = sand.u32 %s122, 1
        %s286 = smul.addr %s285, 4
        %s287 = scalar_lea.vmem [#allocation5], %s286
        // Predicated region
        $region37: #{tpu_custom_call.1} parent=31 // pred_check
          %p288 = pneg %p132
        $region38: #{tpu_custom_call.1} parent=31 // pred_check_branch
          %290 = sbr.rel (%p288) target = $region40
        $region39: #{tpu_custom_call.1} parent=31 // pred_region
          %s292 = ssub.s32 64, 64
          %293 = vsyncadd %s284, %s292
          %s294 = sadd.s32 %s25, %s24
          %s295 = smul.addr %s294, 64
          %s296 = scalar_lea.hbm %s3, %s295
          %s298 = sshll.u32 %s287, 4
          %s299 = int_to_ptr.vmem [resolvable:$true] %s298
          %301 = dma.vmem_to_hbm [thread:$0]  %s299, 64, %s296, %s284
        $region40: #{tpu_custom_call.1} parent=31 // pred_fallthru
          _
      $region32: #{tpu_custom_call.1} parent=5 // pred_fallthru
        _
      %p302 = scmp.le.s32.totalorder 2, %s15
      // Predicated region
      $region41: #{tpu_custom_call.1} parent=5 // pred_check
        %p303 = pneg %p302
      $region42: #{tpu_custom_call.1} parent=5 // pred_check_branch
        %305 = sbr.rel (%p303) target = $region44
      $region43: #{tpu_custom_call.1} parent=5 // pred_region
        %s306 = ssub.s32 %s15, 2
        // Predicated region
        $region45: #{tpu_custom_call.1} parent=43 // pred_check
          %p307 = pneg %p138
        $region46: #{tpu_custom_call.1} parent=43 // pred_check_branch
          %309 = sbr.rel (%p307) target = $region48
        $region47: #{tpu_custom_call.1} parent=43 // pred_region
          %s310 = sand.u32 %s123, 1
          %s311 = scalar_lea.sflag [#allocation4], %s310
          %s312 = sand.u32 %s123, 1
          %s313 = smul.addr %s312, 4
          %s314 = scalar_lea.vmem [#allocation5], %s313
          %315 = dma.done %s311, 64
        $region48: #{tpu_custom_call.1} parent=43 // pred_fallthru
          _
      $region44: #{tpu_custom_call.1} parent=5 // pred_fallthru
        _
    $region6: #{tpu_custom_call.1} parent=1 // loop_footer
      %s19 = sadd.s32 1, %s15
    $region7: #{tpu_custom_call.1} parent=1 // loop_footer_branch
      %14 = sbr.rel target = $region3
    $region8: #{tpu_custom_call.1} parent=1 // loop_exit
      _
    %316 = vsyncpa [#allocation3], 1
    %s317 = scalar_lea.sflag [#allocation3], 1
    %318 = vsyncpa %s317, 1
    %319 = vsyncpa [#allocation4], 1
    %s320 = scalar_lea.sflag [#allocation4], 1
    %321 = vsyncpa %s320, 1

</llo_original>
